<compile_context>
chip_gen: v7x
topology: tpu7x:2x2x1
jax: 0.10.0
libtpu: 0.0.40
codegen_flags: <defaults>
</compile_context>

<pallas_src>
import functools

import jax
import jax.numpy as jnp
from jax import lax
from jax.experimental import pallas as pl
from jax.experimental.pallas import tpu as pltpu


def _cil_loss_kernel(p_ref, t_ref, out_ref, acc_sq, acc_ab, acc_d2,
                     *, fs, smooth, inv_n, length, acc_rows):
    """Accumulate partial sums over the 'arbitrary' (reduction) grid axis."""
    j = pl.program_id(1)

    @pl.when(j == 0)
    def _init():
        acc_sq[...] = jnp.zeros_like(acc_sq)
        acc_ab[...] = jnp.zeros_like(acc_ab)
        acc_d2[...] = jnp.zeros_like(acc_d2)

    d = p_ref[...].astype(jnp.float32) - t_ref[...].astype(jnp.float32)
    rows = d.shape[0]
    g = rows // acc_rows

    # --- MSE / MAE partial sums (pure VPU; cross-lane reduce deferred) -------
    sq = d * d
    acc_sq[...] += jnp.sum(sq.reshape(g, acc_rows, length), axis=0)
    ab = jnp.abs(d)
    acc_ab[...] += jnp.sum(ab.reshape(g, acc_rows, length), axis=0)

    # --- second difference (diff2 is linear: diff2(p) - diff2(t) == diff2(d))
    # d2[:, k] = d[:, k+2] - 2*d[:, k+1] + d[:, k], valid for k < L-2.
    # Use XLU lane rotation (shift L-1 == -1, L-2 == -2) to keep full lane-dense
    # tiles, and mask out the two wrap-around columns before squaring.
    d_p1 = pltpu.roll(d, shift=length - 1, axis=1)   # d[:, k+1] (wraps at end)
    d_p2 = pltpu.roll(d, shift=length - 2, axis=1)   # d[:, k+2] (wraps at end)
    col = lax.broadcasted_iota(jnp.int32, d.shape, 1)
    d2 = jnp.where(col < length - 2, (d_p2 - d_p1) - (d_p1 - d), 0.0)
    d2sq = d2 * d2
    acc_d2[...] += jnp.sum(d2sq.reshape(g, acc_rows, length), axis=0)

    @pl.when(j == pl.num_programs(1) - 1)
    def _finalize():
        # Single cross-lane reduction per partial, plus the scalar combine.
        part = (fs * inv_n * jnp.sum(acc_sq[...])
                + (1.0 - fs) * inv_n * jnp.sum(acc_ab[...])
                + smooth * jnp.sum(acc_d2[...]))
        # Lane-dense (1, 8, 128) output block; every element carries the same
        # per-partial value, the wrapper reads [p, 0, 0].
        out_ref[...] = jnp.full(out_ref.shape, part, dtype=jnp.float32)


def _pick_tile_rows(batch, length, max_tile_bytes):
    """Largest row-tile (multiple of 8, divisor of batch) under the byte budget."""
    bytes_per_row = length * 4
    max_rows = max(1, max_tile_bytes // bytes_per_row)
    if batch <= max_rows:
        return batch                      # whole array fits: single block
    cand = (max_rows // 8) * 8
    while cand >= 8:
        if batch % cand == 0:
            return cand
        cand -= 8
    # TODO(synk): ragged / odd batch sizes fall back to a single (possibly large)
    # block; a halo-tiled length split would handle these without blowing VMEM.
    return batch


def cil_loss(predictions, targets, fs, smooth, *, max_tile_bytes=4 * 1024 * 1024):
    assert predictions.shape == targets.shape
    B, L = predictions.shape
    n = B * L  # element count for the 'mean' reduction of MSE / MAE

    tile_rows = _pick_tile_rows(B, L, max_tile_bytes)
    num_tiles = B // tile_rows
    # Leading 'parallel' axis: lets the two v7x TensorCores each produce a
    # partial; harmless (one extra finalize) on single-core v5e/v6e.
    P = 2 if (num_tiles >= 2 and num_tiles % 2 == 0) else 1
    steps = num_tiles // P
    acc_rows = 8 if tile_rows % 8 == 0 else tile_rows

    kernel = functools.partial(
        _cil_loss_kernel,
        fs=float(fs), smooth=float(smooth), inv_n=1.0 / float(n),
        length=L, acc_rows=acc_rows,
    )

    partials = pl.pallas_call(
        kernel,
        out_shape=jax.ShapeDtypeStruct((P, 8, 128), jnp.float32),
        grid_spec=pltpu.PrefetchScalarGridSpec(
            num_scalar_prefetch=0,
            grid=(P, steps),
            in_specs=[
                pl.BlockSpec((tile_rows, L), lambda p, j: (p * steps + j, 0)),
                pl.BlockSpec((tile_rows, L), lambda p, j: (p * steps + j, 0)),
            ],
            out_specs=pl.BlockSpec((1, 8, 128), lambda p, j: (p, 0, 0)),
            scratch_shapes=[
                pltpu.VMEM((acc_rows, L), jnp.float32),  # sum d^2
                pltpu.VMEM((acc_rows, L), jnp.float32),  # sum |d|
                pltpu.VMEM((acc_rows, L), jnp.float32),  # sum diff2(d)^2
            ],
        ),
        compiler_params=pltpu.CompilerParams(
            dimension_semantics=("parallel", "arbitrary"),
            # Above the 16/32 MiB v5e/v6e scoped defaults, below v7x's 64 MiB.
            vmem_limit_bytes=48 * 1024 * 1024,
        ),
    )(predictions, targets)

    # Combine per-core/per-p partial losses (already weighted inside the kernel).
    return jnp.sum(partials[:, 0, 0])


def cil_loss_ref(p, t, fs, smooth):
    """Plain-JAX reference reproducing the PyTorch semantics."""
    d2p = jnp.diff(jnp.diff(p, axis=-1), axis=-1)
    d2t = jnp.diff(jnp.diff(t, axis=-1), axis=-1)
    diff_2 = jnp.sum((d2p - d2t) ** 2)
    mse = jnp.mean((p - t) ** 2)
    mae = jnp.mean(jnp.abs(p - t))
    return fs * mse + (1.0 - fs) * mae + smooth * diff_2


if __name__ == "__main__":
    # Loss "parameters" (from the module's __init__ args).
    fs = 0.7
    smooth = 0.01

    key = jax.random.PRNGKey(0)
    kp, kt = jax.random.split(key)

    # Test 1: small demo problem -> collapses to a single grid step / block.
    B, L = 16, 256
    predictions = jax.random.normal(kp, (B, L), dtype=jnp.float32)
    targets = jax.random.normal(kt, (B, L), dtype=jnp.float32)
    loss = jax.block_until_ready(cil_loss(predictions, targets, fs, smooth))
    ref = cil_loss_ref(predictions, targets, fs, smooth)
    assert jnp.allclose(loss, ref, rtol=1e-4, atol=1e-4), (loss, ref)

    # Test 2: force multi-tile path (tile_rows=8 -> grid=(2,4)) to exercise the
    # parallel partials, accumulator init/finalize and roll+mask diff2 across tiles.
    B2, L2 = 64, 256
    kp2, kt2 = jax.random.split(jax.random.PRNGKey(1))
    p2 = jax.random.normal(kp2, (B2, L2), dtype=jnp.float32)
    t2 = jax.random.normal(kt2, (B2, L2), dtype=jnp.float32)
    loss2 = jax.block_until_ready(
        cil_loss(p2, t2, fs, smooth, max_tile_bytes=8 * 1024))
    ref2 = cil_loss_ref(p2, t2, fs, smooth)
    assert jnp.allclose(loss2, ref2, rtol=1e-4, atol=1e-4), (loss2, ref2)

    print("KERNEL_OK")
</pallas_src>

<mosaic_0001>
module attributes {stable_mosaic.version = 11 : i64} {
  func.func @_cil_loss_kernel(%arg0: i32, %arg1: i32, %arg2: memref<16x256xf32, #tpu.memory_space<vmem>>, %arg3: memref<16x256xf32, #tpu.memory_space<vmem>>, %arg4: memref<1x8x128xf32, #tpu.memory_space<vmem>>, %arg5: memref<8x256xf32, #tpu.memory_space<vmem>>, %arg6: memref<8x256xf32, #tpu.memory_space<vmem>>, %arg7: memref<8x256xf32, #tpu.memory_space<vmem>>) attributes {dimension_semantics = [#tpu.dimension_semantics<parallel>, #tpu.dimension_semantics<arbitrary>], iteration_bounds = array<i64: 1, 1>, scalar_prefetch = 0 : i64, scratch_operands = 3 : i64, tpu.core_type = #tpu.core_type<tc>, window_params = [{transform_indices = @transform_0, window_bounds = array<i64: 16, 256>}, {transform_indices = @transform_1, window_bounds = array<i64: 16, 256>}, {transform_indices = @transform_2, window_bounds = array<i64: 1, 8, 128>}]} {
    %c0_i32 = arith.constant 0 : i32
    %0 = arith.cmpi eq, %arg1, %c0_i32 : i32
    %1 = arith.extui %0 : i1 to i32
    %c0_i32_0 = arith.constant 0 : i32
    %2 = arith.cmpi ne, %1, %c0_i32_0 : i32
    scf.if %2 {
      %cst_22 = arith.constant 0.000000e+00 : f32
      %37 = vector.broadcast %cst_22 : f32 to vector<8x256xf32>
      %c0_23 = arith.constant 0 : index
      %c0_24 = arith.constant 0 : index
      %38 = vector.load %arg5[%c0_23, %c0_24] : memref<8x256xf32, #tpu.memory_space<vmem>>, vector<8x256xf32>
      tpu.vector_store %arg5[%c0_23, %c0_24], %37 {strides = array<i32>} : memref<8x256xf32, #tpu.memory_space<vmem>>, vector<8x256xf32>,
      %cst_25 = arith.constant 0.000000e+00 : f32
      %39 = vector.broadcast %cst_25 : f32 to vector<8x256xf32>
      %c0_26 = arith.constant 0 : index
      %c0_27 = arith.constant 0 : index
      %40 = vector.load %arg6[%c0_26, %c0_27] : memref<8x256xf32, #tpu.memory_space<vmem>>, vector<8x256xf32>
      tpu.vector_store %arg6[%c0_26, %c0_27], %39 {strides = array<i32>} : memref<8x256xf32, #tpu.memory_space<vmem>>, vector<8x256xf32>,
      %cst_28 = arith.constant 0.000000e+00 : f32
      %41 = vector.broadcast %cst_28 : f32 to vector<8x256xf32>
      %c0_29 = arith.constant 0 : index
      %c0_30 = arith.constant 0 : index
      %42 = vector.load %arg7[%c0_29, %c0_30] : memref<8x256xf32, #tpu.memory_space<vmem>>, vector<8x256xf32>
      tpu.vector_store %arg7[%c0_29, %c0_30], %41 {strides = array<i32>} : memref<8x256xf32, #tpu.memory_space<vmem>>, vector<8x256xf32>,
    } else {
    }
    %c0 = arith.constant 0 : index
    %c0_1 = arith.constant 0 : index
    %3 = vector.load %arg2[%c0, %c0_1] : memref<16x256xf32, #tpu.memory_space<vmem>>, vector<16x256xf32>
    %c0_2 = arith.constant 0 : index
    %c0_3 = arith.constant 0 : index
    %4 = vector.load %arg3[%c0_2, %c0_3] : memref<16x256xf32, #tpu.memory_space<vmem>>, vector<16x256xf32>
    %5 = arith.subf %3, %4 : vector<16x256xf32>
    %6 = arith.mulf %5, %5 : vector<16x256xf32>
    %c0_4 = arith.constant 0 : index
    %c0_5 = arith.constant 0 : index
    %7 = vector.load %arg5[%c0_4, %c0_5] : memref<8x256xf32, #tpu.memory_space<vmem>>, vector<8x256xf32>
    %8 = vector.shape_cast %6 : vector<16x256xf32> to vector<2x8x256xf32>
    %cst = arith.constant dense<0.000000e+00> : vector<8x256xf32>
    %9 = vector.multi_reduction <add>, %8, %cst [0] : vector<2x8x256xf32> to vector<8x256xf32>
    %10 = arith.addf %7, %9 : vector<8x256xf32>
    %c0_6 = arith.constant 0 : index
    %c0_7 = arith.constant 0 : index
    %11 = vector.load %arg5[%c0_6, %c0_7] : memref<8x256xf32, #tpu.memory_space<vmem>>, vector<8x256xf32>
    tpu.vector_store %arg5[%c0_6, %c0_7], %10 {strides = array<i32>} : memref<8x256xf32, #tpu.memory_space<vmem>>, vector<8x256xf32>,
    %12 = math.absf %5 : vector<16x256xf32>
    %c0_8 = arith.constant 0 : index
    %c0_9 = arith.constant 0 : index
    %13 = vector.load %arg6[%c0_8, %c0_9] : memref<8x256xf32, #tpu.memory_space<vmem>>, vector<8x256xf32>
    %14 = vector.shape_cast %12 : vector<16x256xf32> to vector<2x8x256xf32>
    %cst_10 = arith.constant dense<0.000000e+00> : vector<8x256xf32>
    %15 = vector.multi_reduction <add>, %14, %cst_10 [0] : vector<2x8x256xf32> to vector<8x256xf32>
    %16 = arith.addf %13, %15 : vector<8x256xf32>
    %c0_11 = arith.constant 0 : index
    %c0_12 = arith.constant 0 : index
    %17 = vector.load %arg6[%c0_11, %c0_12] : memref<8x256xf32, #tpu.memory_space<vmem>>, vector<8x256xf32>
    tpu.vector_store %arg6[%c0_11, %c0_12], %16 {strides = array<i32>} : memref<8x256xf32, #tpu.memory_space<vmem>>, vector<8x256xf32>,
    %c255_i32 = arith.constant 255 : i32
    %18 = tpu.dynamic_rotate %5 by %c255_i32 dim 1 : vector<16x256xf32>, i32 -> vector<16x256xf32>
    %c254_i32 = arith.constant 254 : i32
    %19 = tpu.dynamic_rotate %5 by %c254_i32 dim 1 : vector<16x256xf32>, i32 -> vector<16x256xf32>
    %20 = tpu.iota {dimensions = array<i32: 1>} : vector<16x256xi32>
    %c254_i32_13 = arith.constant 254 : i32
    %21 = vector.broadcast %c254_i32_13 : i32 to vector<16x256xi32>
    %22 = arith.cmpi slt, %20, %21 : vector<16x256xi32>
    %23 = arith.subf %19, %18 : vector<16x256xf32>
    %24 = arith.subf %18, %5 : vector<16x256xf32>
    %25 = arith.subf %23, %24 : vector<16x256xf32>
    %cst_14 = arith.constant 0.000000e+00 : f32
    %26 = vector.broadcast %cst_14 : f32 to vector<16x256xf32>
    %27 = arith.select %22, %25, %26 : vector<16x256xi1>, vector<16x256xf32>
    %28 = arith.mulf %27, %27 : vector<16x256xf32>
    %c0_15 = arith.constant 0 : index
    %c0_16 = arith.constant 0 : index
    %29 = vector.load %arg7[%c0_15, %c0_16] : memref<8x256xf32, #tpu.memory_space<vmem>>, vector<8x256xf32>
    %30 = vector.shape_cast %28 : vector<16x256xf32> to vector<2x8x256xf32>
    %cst_17 = arith.constant dense<0.000000e+00> : vector<8x256xf32>
    %31 = vector.multi_reduction <add>, %30, %cst_17 [0] : vector<2x8x256xf32> to vector<8x256xf32>
    %32 = arith.addf %29, %31 : vector<8x256xf32>
    %c0_18 = arith.constant 0 : index
    %c0_19 = arith.constant 0 : index
    %33 = vector.load %arg7[%c0_18, %c0_19] : memref<8x256xf32, #tpu.memory_space<vmem>>, vector<8x256xf32>
    tpu.vector_store %arg7[%c0_18, %c0_19], %32 {strides = array<i32>} : memref<8x256xf32, #tpu.memory_space<vmem>>, vector<8x256xf32>,
    %c0_i32_20 = arith.constant 0 : i32
    %34 = arith.cmpi eq, %arg1, %c0_i32_20 : i32
    %35 = arith.extui %34 : i1 to i32
    %c0_i32_21 = arith.constant 0 : i32
    %36 = arith.cmpi ne, %35, %c0_i32_21 : i32
    scf.if %36 {
      %c0_22 = arith.constant 0 : index
      %c0_23 = arith.constant 0 : index
      %37 = vector.load %arg5[%c0_22, %c0_23] : memref<8x256xf32, #tpu.memory_space<vmem>>, vector<8x256xf32>
      %38 = vector.shape_cast %37 : vector<8x256xf32> to vector<1x8x256xf32>
      %cst_24 = arith.constant dense<0.000000e+00> : vector<1xf32>
      %39 = vector.multi_reduction <add>, %38, %cst_24 [1, 2] : vector<1x8x256xf32> to vector<1xf32>
      %40 = vector.shape_cast %39 : vector<1xf32> to vector<1x1x1xf32>
      %41 = vector.extract %40[0, 0, 0] : f32 from vector<1x1x1xf32>
      %cst_25 = arith.constant 1.70898435E-4 : f32
      %42 = arith.mulf %cst_25, %41 : f32
      %c0_26 = arith.constant 0 : index
      %c0_27 = arith.constant 0 : index
      %43 = vector.load %arg6[%c0_26, %c0_27] : memref<8x256xf32, #tpu.memory_space<vmem>>, vector<8x256xf32>
      %44 = vector.shape_cast %43 : vector<8x256xf32> to vector<1x8x256xf32>
      %cst_28 = arith.constant dense<0.000000e+00> : vector<1xf32>
      %45 = vector.multi_reduction <add>, %44, %cst_28 [1, 2] : vector<1x8x256xf32> to vector<1xf32>
      %46 = vector.shape_cast %45 : vector<1xf32> to vector<1x1x1xf32>
      %47 = vector.extract %46[0, 0, 0] : f32 from vector<1x1x1xf32>
      %cst_29 = arith.constant 7.32421904E-5 : f32
      %48 = arith.mulf %cst_29, %47 : f32
      %49 = arith.addf %42, %48 : f32
      %c0_30 = arith.constant 0 : index
      %c0_31 = arith.constant 0 : index
      %50 = vector.load %arg7[%c0_30, %c0_31] : memref<8x256xf32, #tpu.memory_space<vmem>>, vector<8x256xf32>
      %51 = vector.shape_cast %50 : vector<8x256xf32> to vector<1x8x256xf32>
      %cst_32 = arith.constant dense<0.000000e+00> : vector<1xf32>
      %52 = vector.multi_reduction <add>, %51, %cst_32 [1, 2] : vector<1x8x256xf32> to vector<1xf32>
      %53 = vector.shape_cast %52 : vector<1xf32> to vector<1x1x1xf32>
      %54 = vector.extract %53[0, 0, 0] : f32 from vector<1x1x1xf32>
      %cst_33 = arith.constant 0.00999999977 : f32
      %55 = arith.mulf %cst_33, %54 : f32
      %56 = arith.addf %49, %55 : f32
      %57 = vector.broadcast %56 : f32 to vector<1x8x128xf32>
      %c0_34 = arith.constant 0 : index
      %c0_35 = arith.constant 0 : index
      %c0_36 = arith.constant 0 : index
      %58 = vector.load %arg4[%c0_34, %c0_35, %c0_36] : memref<1x8x128xf32, #tpu.memory_space<vmem>>, vector<1x8x128xf32>
      tpu.vector_store %arg4[%c0_34, %c0_35, %c0_36], %57 {strides = array<i32>} : memref<1x8x128xf32, #tpu.memory_space<vmem>>, vector<1x8x128xf32>,
    } else {
    }
    return
  }
  func.func @transform_0(%arg0: i32, %arg1: i32) -> (i32, i32) {
    %c1_i32 = arith.constant 1 : i32
    %0 = arith.muli %arg0, %c1_i32 : i32
    %1 = arith.addi %0, %arg1 : i32
    %c0_i32 = arith.constant 0 : i32
    %c0_i32_0 = arith.constant 0 : i32
    return %1, %c0_i32 : i32, i32
  }
  func.func @transform_1(%arg0: i32, %arg1: i32) -> (i32, i32) {
    %c1_i32 = arith.constant 1 : i32
    %0 = arith.muli %arg0, %c1_i32 : i32
    %1 = arith.addi %0, %arg1 : i32
    %c0_i32 = arith.constant 0 : i32
    %c0_i32_0 = arith.constant 0 : i32
    return %1, %c0_i32 : i32, i32
  }
  func.func @transform_2(%arg0: i32, %arg1: i32) -> (i32, i32, i32) {
    %c0_i32 = arith.constant 0 : i32
    %c0_i32_0 = arith.constant 0 : i32
    %c0_i32_1 = arith.constant 0 : i32
    return %arg0, %c0_i32, %c0_i32_0 : i32, i32, i32
  }
}

</mosaic_0001>

<llo_original>
// kernel: tpu_custom_call.1
$region0: #{tpu_custom_call.1}
  #allocation0 [shape = 'u32[]', space=smem, size = 0x4, offset = 0x4, fixed_abs, tag = 'smem constant byte address 0x4 - core index']
  #allocation1 [shape = 'u32[144,128]{1,0:T(1,128)}', space=vmem, size = 0x12000, scoped, tag = 'internal scratch']
  #allocation2 [shape = 'f32[8,256]{1,0:T(8,128)}', space=vmem, size = 0x2000, scoped, tag = 'scratch operand']
  #allocation3 [shape = 'f32[8,256]{1,0:T(8,128)}', space=vmem, size = 0x2000, scoped, tag = 'scratch operand']
  #allocation4 [shape = 'f32[8,256]{1,0:T(8,128)}', space=vmem, size = 0x2000, scoped, tag = 'scratch operand']
  %s0 = inlined_call_operand.hbm [shape: f32[16,256], index: 0, kind: input, shape index: {}]
  %s1 = inlined_call_operand.hbm [shape: f32[16,256], index: 1, kind: input, shape index: {}]
  %s2 = inlined_call_operand.hbm [shape: f32[1,8,128], index: 2, kind: output, shape index: {}]
  %s3 = sld [smem:[#allocation0]]
  $region34: #{tpu_custom_call.1} parent=0
    _
  %s5 = ssub.s32 1, %s3
  %s6 = scalar_select 0, %s5, %s3
  $region1: #{tpu_custom_call.1} parent=0
    #allocation5 [shape = 'u8[16384]{0}', space=vmem, size = 0x4000, scoped, tag = 'input window, operand 0, single buffered']
    #allocation6 [shape = 's32[1]{0}', space=sflag, size = 0x4, scoped, tag = 'scoped memory for tpu_custom_call.1']
    #allocation7 [shape = 's32[1]{0}', space=sflag, size = 0x4, scoped, tag = 'scoped memory for tpu_custom_call.1']
    #allocation8 [shape = 'u8[16384]{0}', space=vmem, size = 0x4000, scoped, tag = 'input window, operand 1, single buffered']
    #allocation9 [shape = 's32[1]{0}', space=sflag, size = 0x4, scoped, tag = 'scoped memory for tpu_custom_call.1']
    #allocation10 [shape = 'u8[4096]{0}', space=vmem, size = 0x1000, scoped, tag = 'output window, operand 0, single buffered']
    %7 = vsyncpa [#allocation6], 0
    %8 = vsyncpa [#allocation9], 0
    %9 = vsyncpa [#allocation7], 0
    // Predicated region
    $region2: #{tpu_custom_call.1} parent=1 // pred_check
      _
    $region3: #{tpu_custom_call.1} parent=1 // pred_check_branch
      %11 = sbr.rel (0) target = $region5
    $region4: #{tpu_custom_call.1} parent=1 // pred_region
      %s12 = sadd.s32 0, 0
      %s13 = smul.u32 2, %s12
      %s15 = ssub.s32 512, 512
      %16 = vsyncadd [#allocation6], %s15
      %s17 = smul.addr %s13, 2
      %s18 = smul.addr %s17, 128
      %s19 = scalar_lea.hbm %s0, %s18
      %s20 = sshll.u32 [#allocation5], 4
      %s21 = int_to_ptr.vmem [resolvable:$true] %s20
      %26 = dma.hbm_to_vmem [thread:$0]  %s19, 512, %s21, [#allocation6], 256, 256, 16
    $region5: #{tpu_custom_call.1} parent=1 // pred_fallthru
      _
    // Predicated region
    $region6: #{tpu_custom_call.1} parent=1 // pred_check
      _
    $region7: #{tpu_custom_call.1} parent=1 // pred_check_branch
      %28 = sbr.rel (0) target = $region9
    $region8: #{tpu_custom_call.1} parent=1 // pred_region
      %s29 = sadd.s32 0, 0
      %s30 = smul.u32 2, %s29
      %s32 = ssub.s32 512, 512
      %33 = vsyncadd [#allocation9], %s32
      %s34 = smul.addr %s30, 2
      %s35 = smul.addr %s34, 128
      %s36 = scalar_lea.hbm %s1, %s35
      %s37 = sshll.u32 [#allocation8], 4
      %s38 = int_to_ptr.vmem [resolvable:$true] %s37
      %43 = dma.hbm_to_vmem [thread:$0]  %s36, 512, %s38, [#allocation9], 256, 256, 16
    $region9: #{tpu_custom_call.1} parent=1 // pred_fallthru
      _
    // Predicated region
    $region10: #{tpu_custom_call.1} parent=1 // pred_check
      _
    $region11: #{tpu_custom_call.1} parent=1 // pred_check_branch
      %45 = sbr.rel (0) target = $region13
    $region12: #{tpu_custom_call.1} parent=1 // pred_region
      %46 = dma.done [#allocation6], 512
    $region13: #{tpu_custom_call.1} parent=1 // pred_fallthru
      _
    // Predicated region
    $region14: #{tpu_custom_call.1} parent=1 // pred_check
      _
    $region15: #{tpu_custom_call.1} parent=1 // pred_check_branch
      %48 = sbr.rel (0) target = $region17
    $region16: #{tpu_custom_call.1} parent=1 // pred_region
      %49 = dma.done [#allocation9], 512
    $region17: #{tpu_custom_call.1} parent=1 // pred_fallthru
      _
    %s50 = sadd.s32 0, 0
    %s51 = smul.u32 2, %s50
    %s52 = sadd.s32 0, 0
    %s53 = smul.u32 2, %s52
    %p54 = scmp.eq.s32.totalorder 0, 0
    // Predicated region
    $region18: #{tpu_custom_call.1} parent=1 // pred_check
      %p55 = pneg %p54
    $region19: #{tpu_custom_call.1} parent=1 // pred_check_branch
      %57 = sbr.rel (%p55) target = $region21
    $region20: #{tpu_custom_call.1} parent=1 // pred_region
      %58 = vst [vmem:[#allocation2] sm:$0xff] 0.0
      %59 = vst [vmem:[#allocation2 + $0x8] sm:$0xff] 0.0
      %60 = vst [vmem:[#allocation3] sm:$0xff] 0.0
      %61 = vst [vmem:[#allocation3 + $0x8] sm:$0xff] 0.0
      %62 = vst [vmem:[#allocation4] sm:$0xff] 0.0
      %63 = vst [vmem:[#allocation4 + $0x8] sm:$0xff] 0.0
    $region21: #{tpu_custom_call.1} parent=1 // pred_fallthru
      _
    %v64 = vld [vmem:[#allocation5] sm:$0xff]
    %v65 = vld [vmem:[#allocation5 + $0x8] sm:$0xff]
    %v66 = vld [vmem:[#allocation5 + $0x10] sm:$0xff]
    %v67 = vld [vmem:[#allocation5 + $0x18] sm:$0xff]
    %v68 = vld [vmem:[#allocation8] sm:$0xff]
    %v69 = vld [vmem:[#allocation8 + $0x8] sm:$0xff]
    %v70 = vld [vmem:[#allocation8 + $0x10] sm:$0xff]
    %v71 = vld [vmem:[#allocation8 + $0x18] sm:$0xff]
    %v72 = vsub.f32 %v64, %v68
    %v73 = vsub.f32 %v65, %v69
    %v74 = vsub.f32 %v66, %v70
    %v75 = vsub.f32 %v67, %v71
    %v76 = vmul.f32 %v72, %v72
    %v77 = vmul.f32 %v73, %v73
    %v78 = vmul.f32 %v74, %v74
    %v79 = vmul.f32 %v75, %v75
    %v80 = vld [vmem:[#allocation2] sm:$0xff]
    %v81 = vld [vmem:[#allocation2 + $0x8] sm:$0xff]
    %v82 = vadd.f32 %v76, %v78
    %v83 = vadd.f32 %v77, %v79
    %v84 = vadd.f32 %v80, %v82
    %v85 = vadd.f32 %v81, %v83
    %86 = vst [vmem:[#allocation2] sm:$0xff] %v84
    %87 = vst [vmem:[#allocation2 + $0x8] sm:$0xff] %v85
    %v88 = vand.u32 2147483647, %v72
    %v89 = vand.u32 2147483647, %v73
    %v90 = vand.u32 2147483647, %v74
    %v91 = vand.u32 2147483647, %v75
    %v92 = vld [vmem:[#allocation3] sm:$0xff]
    %v93 = vld [vmem:[#allocation3 + $0x8] sm:$0xff]
    %v94 = vadd.f32 %v88, %v90
    %v95 = vadd.f32 %v89, %v91
    %v96 = vadd.f32 %v92, %v94
    %v97 = vadd.f32 %v93, %v95
    %98 = vst [vmem:[#allocation3] sm:$0xff] %v96
    %99 = vst [vmem:[#allocation3 + $0x8] sm:$0xff] %v97
    %100 = vrot.lane.b32.xlu0 %v72, 127
    %v101 = vpop.permute.xlu0 %100
    %102 = vrot.lane.b32.xlu0 %v74, 127
    %v103 = vpop.permute.xlu0 %102
    %104 = vrot.lane.b32.xlu0 %v73, 127
    %v105 = vpop.permute.xlu0 %104
    %106 = vrot.lane.b32.xlu0 %v75, 127
    %v107 = vpop.permute.xlu0 %106
    %v108 = vlaneseq
    %v109 = vand.u32 %v108, 127
    %vm110 = vcmp.lt.s32.totalorder %v109, 127
    %v111 = vsel %vm110, %v101, %v105
    %v112 = vsel %vm110, %v103, %v107
    %v113 = vsel %vm110, %v105, %v101
    %v114 = vsel %vm110, %v107, %v103
    %115 = vrot.lane.b32.xlu0 %v72, 126
    %v116 = vpop.permute.xlu0 %115
    %117 = vrot.lane.b32.xlu0 %v74, 126
    %v118 = vpop.permute.xlu0 %117
    %119 = vrot.lane.b32.xlu0 %v73, 126
    %v120 = vpop.permute.xlu0 %119
    %121 = vrot.lane.b32.xlu0 %v75, 126
    %v122 = vpop.permute.xlu0 %121
    %vm123 = vcmp.lt.s32.totalorder %v109, 126
    %v124 = vsel %vm123, %v116, %v120
    %v125 = vsel %vm123, %v118, %v122
    %v126 = vsel %vm123, %v120, %v116
    %v127 = vsel %vm123, %v122, %v118
    %v128 = vadd.s32 %v109, 128
    %vm129 = vcmp.lt.s32.totalorder %v109, 254
    %vm130 = vcmp.lt.s32.totalorder %v128, 254
    %v131 = vsub.f32 %v124, %v111
    %v132 = vsub.f32 %v126, %v113
    %v133 = vsub.f32 %v125, %v112
    %v134 = vsub.f32 %v127, %v114
    %v135 = vsub.f32 %v111, %v72
    %v136 = vsub.f32 %v113, %v73
    %v137 = vsub.f32 %v112, %v74
    %v138 = vsub.f32 %v114, %v75
    %v139 = vsub.f32 %v131, %v135
    %v140 = vsub.f32 %v132, %v136
    %v141 = vsub.f32 %v133, %v137
    %v142 = vsub.f32 %v134, %v138
    %v143 = vsel %vm129, %v139, 0.0
    %v144 = vsel %vm130, %v140, 0.0
    %v145 = vsel %vm129, %v141, 0.0
    %v146 = vsel %vm130, %v142, 0.0
    %v147 = vmul.f32 %v143, %v143
    %v148 = vmul.f32 %v144, %v144
    %v149 = vmul.f32 %v145, %v145
    %v150 = vmul.f32 %v146, %v146
    %v151 = vld [vmem:[#allocation4] sm:$0xff]
    %v152 = vld [vmem:[#allocation4 + $0x8] sm:$0xff]
    %v153 = vadd.f32 %v147, %v149
    %v154 = vadd.f32 %v148, %v150
    %v155 = vadd.f32 %v151, %v153
    %v156 = vadd.f32 %v152, %v154
    %157 = vst [vmem:[#allocation4] sm:$0xff] %v155
    %158 = vst [vmem:[#allocation4 + $0x8] sm:$0xff] %v156
    // Predicated region
    $region22: #{tpu_custom_call.1} parent=1 // pred_check
      %p159 = pneg %p54
    $region23: #{tpu_custom_call.1} parent=1 // pred_check_branch
      %161 = sbr.rel (%p159) target = $region25
    $region24: #{tpu_custom_call.1} parent=1 // pred_region
      %v162 = vld [vmem:[#allocation2] sm:$0xff]
      %v163 = vld [vmem:[#allocation2 + $0x8] sm:$0xff]
      %v164 = vadd.f32 %v162, %v163
      %165 = vadd.xlane.f32.xlu0 %v164
      %v166 = vpop.xlane.xlu0 %165
      %v167 = vrot.slane %v166, 4
      %v168 = vadd.f32 %v166, %v167
      %v169 = vrot.slane %v168, 2
      %v170 = vadd.f32 %v168, %v169
      %v171 = vrot.slane %v170, 1
      %v172 = vadd.f32 %v170, %v171
      %s173 = vtos %v172
      %s174 = smul.f32 %s173, 0.00017089843
      %v175 = vld [vmem:[#allocation3] sm:$0xff]
      %v176 = vld [vmem:[#allocation3 + $0x8] sm:$0xff]
      %v177 = vadd.f32 %v175, %v176
      %178 = vadd.xlane.f32.xlu0 %v177
      %v179 = vpop.xlane.xlu0 %178
      %v180 = vrot.slane %v179, 4
      %v181 = vadd.f32 %v179, %v180
      %v182 = vrot.slane %v181, 2
      %v183 = vadd.f32 %v181, %v182
      %v184 = vrot.slane %v183, 1
      %v185 = vadd.f32 %v183, %v184
      %s186 = vtos %v185
      %s187 = smul.f32 %s186, 7.324219e-05
      %s188 = sadd.f32 %s174, %s187
      %v189 = vld [vmem:[#allocation4] sm:$0xff]
      %v190 = vld [vmem:[#allocation4 + $0x8] sm:$0xff]
      %v191 = vadd.f32 %v189, %v190
      %192 = vadd.xlane.f32.xlu0 %v191
      %v193 = vpop.xlane.xlu0 %192
      %v194 = vrot.slane %v193, 4
      %v195 = vadd.f32 %v193, %v194
      %v196 = vrot.slane %v195, 2
      %v197 = vadd.f32 %v195, %v196
      %v198 = vrot.slane %v197, 1
      %v199 = vadd.f32 %v197, %v198
      %s200 = vtos %v199
      %s201 = smul.f32 %s200, 0.01
      %s202 = sadd.f32 %s188, %s201
      %v203 = vstv %s202
      %204 = vst [vmem:[#allocation10] sm:$0xff] %v203
    $region25: #{tpu_custom_call.1} parent=1 // pred_fallthru
      _
    // Predicated region
    $region26: #{tpu_custom_call.1} parent=1 // pred_check
      _
    $region27: #{tpu_custom_call.1} parent=1 // pred_check_branch
      %206 = sbr.rel (0) target = $region29
    $region28: #{tpu_custom_call.1} parent=1 // pred_region
      %s208 = ssub.s32 128, 128
      %209 = vsyncadd [#allocation7], %s208
      %s211 = sshll.u32 [#allocation10], 4
      %s212 = int_to_ptr.vmem [resolvable:$true] %s211
      %214 = dma.vmem_to_hbm [thread:$0]  %s212, 128, %s2, [#allocation7]
    $region29: #{tpu_custom_call.1} parent=1 // pred_fallthru
      _
    // Predicated region
    $region30: #{tpu_custom_call.1} parent=1 // pred_check
      _
    $region31: #{tpu_custom_call.1} parent=1 // pred_check_branch
      %216 = sbr.rel (0) target = $region33
    $region32: #{tpu_custom_call.1} parent=1 // pred_region
      %217 = dma.done [#allocation7], 128
    $region33: #{tpu_custom_call.1} parent=1 // pred_fallthru
      _
    %218 = vsyncpa [#allocation6], 1
    %219 = vsyncpa [#allocation9], 1
    %220 = vsyncpa [#allocation7], 1

</llo_original>
